<compile_context>
chip_gen: v7x
topology: tpu7x:2x2x1
jax: 0.10.0
libtpu: 0.0.40
codegen_flags: <defaults>
</compile_context>

<pallas_src>
import functools

import jax
import jax.numpy as jnp
import numpy as np
from jax.experimental import pallas as pl
from jax.experimental.pallas import tpu as pltpu

NUM_BEV_FEATURES = 64          # model_cfg.NUM_BEV_FEATURES
VIS_CHANNELS = 40              # conv_visi input channels
PMEAN_CHANNELS = 3             # points_mean channels


def _pick_tile(total, target, align=8):
    """Largest divisor of `total` that is <= target and a multiple of `align`."""
    best = total
    d = align
    limit = min(total, max(target, align))
    while d <= limit:
        if total % d == 0:
            best = d
        d += align
    return best


# --------------------------------------------------------------------------
# Kernel 1: pillar scatter.
#   sorted pillar rows -> dense (B, ny*nx, 64) spatial + (B, ny*nx, 4) pmean,
#   one row tile per grid step, pillar range per tile from scalar prefetch.
# --------------------------------------------------------------------------
def _scatter_kernel(tile_starts_ref, idx_ref, pf_ref, pm_ref,
                    sp_ref, pm_out_ref, *, tile_rows, num_tiles):
    b = pl.program_id(0)
    t = pl.program_id(1)

    # Per-tile zero init: a cheap VMEM memset overlapped by the pipeline.
    # (A pre-zeroed HBM buffer + input_output_aliases would instead cost a
    # full HBM read of zeros per tile.)
    sp_ref[...] = jnp.zeros_like(sp_ref)
    pm_out_ref[...] = jnp.zeros_like(pm_out_ref)

    g = b * num_tiles + t
    start = tile_starts_ref[g]
    end = tile_starts_ref[g + 1]
    base = t * tile_rows

    def body(p, carry):
        r = idx_ref[p] - base               # row inside this tile
        sp_ref[r] = pf_ref[p]
        pm_out_ref[r] = pm_ref[p]
        return carry

    jax.lax.fori_loop(start, end, body, 0)  # only this tile's pillars


def pillar_scatter(tile_starts, idx_sorted, pf_sorted, pm_sorted,
                   batch_size, nynx, tile_rows):
    P, C = pf_sorted.shape
    CP = pm_sorted.shape[1]
    num_tiles = nynx // tile_rows
    kern = functools.partial(_scatter_kernel, tile_rows=tile_rows,
                             num_tiles=num_tiles)
    grid_spec = pltpu.PrefetchScalarGridSpec(
        num_scalar_prefetch=2,             # tile_starts, idx_sorted -> SMEM
        grid=(batch_size, num_tiles),
        in_specs=[
            pl.BlockSpec((P, C), lambda b, t, *_: (0, 0)),    # sorted pillar feats
            pl.BlockSpec((P, CP), lambda b, t, *_: (0, 0)),   # sorted pmean rows
        ],
        out_specs=[
            pl.BlockSpec((None, tile_rows, C), lambda b, t, *_: (b, t, 0)),
            pl.BlockSpec((None, tile_rows, CP), lambda b, t, *_: (b, t, 0)),
        ],
    )
    return pl.pallas_call(
        kern,
        grid_spec=grid_spec,
        out_shape=(
            jax.ShapeDtypeStruct((batch_size, nynx, C), pf_sorted.dtype),
            jax.ShapeDtypeStruct((batch_size, nynx, CP), pm_sorted.dtype),
        ),
        compiler_params=pltpu.CompilerParams(
            dimension_semantics=("parallel", "parallel")),
    )(tile_starts, idx_sorted, pf_sorted, pm_sorted)


# --------------------------------------------------------------------------
# Kernel 2: fused visibility encode + 3x3 conv (40->64, pad=1, no bias)
#           + ReLU + residual add, row-tiled with 1-row halos.
# --------------------------------------------------------------------------
def _conv_kernel(vmm_ref, visc_ref, vist_ref, visb_ref, w_ref, sp_ref, out_ref,
                 xenc_ref, *, tile_h, W, cv, cout, fold_kx):
    t = pl.program_id(1)
    num_t = pl.num_programs(1)
    vmin = vmm_ref[0]
    vmax = vmm_ref[1]

    def enc(v):
        vf = v.astype(jnp.float32)
        # torch assignment order: min->0.4, unknown->0.5, max->0.7 (max wins
        # in the degenerate vmin == vmax case).
        return jnp.where(vf == vmax, 0.7,
                         jnp.where(vf == vmin, 0.4, 0.5)).astype(jnp.float32)

    # Assemble the zero-padded, encoded input tile (tile_h+2, W+2, cv).
    xenc_ref[...] = jnp.zeros_like(xenc_ref)
    xenc_ref[1:tile_h + 1, 1:W + 1, :] = enc(visc_ref[0])

    @pl.when(t > 0)
    def _():                                  # top halo row (last row of tile t-1)
        xenc_ref[0:1, 1:W + 1, :] = enc(vist_ref[0])

    @pl.when(t < num_t - 1)
    def _():                                  # bottom halo row (first row of tile t+1)
        xenc_ref[tile_h + 1:tile_h + 2, 1:W + 1, :] = enc(visb_ref[0])

    xp = xenc_ref[...]
    acc = jnp.zeros((tile_h * W, cout), jnp.float32)
    if fold_kx:
        # Fold the 3 kx taps into the contraction dim: 3 bf16 matmuls, K=3*cv.
        xcat = jnp.concatenate(
            [xp[:, 0:W, :], xp[:, 1:W + 1, :], xp[:, 2:W + 2, :]], axis=-1)
        xcat = xcat.astype(jnp.bfloat16)
        for ky in range(3):
            patch = xcat[ky:ky + tile_h].reshape(tile_h * W, 3 * cv)
            acc = acc + jnp.dot(patch, w_ref[ky].astype(jnp.bfloat16),
                                preferred_element_type=jnp.float32)
    else:
        # Per-tap K=cv matmuls (identical math, no lane concatenation).
        for ky in range(3):
            for kx in range(3):
                patch = xp[ky:ky + tile_h, kx:kx + W, :].reshape(
                    tile_h * W, cv).astype(jnp.bfloat16)
                wk = w_ref[ky, kx * cv:(kx + 1) * cv, :].astype(jnp.bfloat16)
                acc = acc + jnp.dot(patch, wk,
                                    preferred_element_type=jnp.float32)

    out_ref[0] = (jnp.maximum(acc, 0.0) + sp_ref[0]).astype(out_ref.dtype)


def conv_visi_relu_add(vminmax, vis, wfold, sp_dense, tile_h, *, fold_kx=True):
    B, H, W, CV = vis.shape
    cout = wfold.shape[-1]
    assert H % tile_h == 0 and (tile_h * W) % 8 == 0
    num_t = H // tile_h
    kern = functools.partial(_conv_kernel, tile_h=tile_h, W=W, cv=CV,
                             cout=cout, fold_kx=fold_kx)
    return pl.pallas_call(
        kern,
        out_shape=jax.ShapeDtypeStruct((B, H * W, cout), jnp.float32),
        grid=(B, num_t),
        in_specs=[
            pl.BlockSpec(memory_space=pltpu.MemorySpace.SMEM),         # (vmin, vmax)
            pl.BlockSpec((1, tile_h, W, CV), lambda b, t: (b, t, 0, 0)),   # center rows
            pl.BlockSpec((1, 1, W, CV),                                    # top halo row
                         lambda b, t: (b, jnp.maximum(t * tile_h - 1, 0), 0, 0)),
            pl.BlockSpec((1, 1, W, CV),                                    # bottom halo row
                         lambda b, t: (b, jnp.minimum((t + 1) * tile_h, H - 1), 0, 0)),
            pl.BlockSpec((3, 3 * CV, cout), lambda b, t: (0, 0, 0)),       # folded weight
            pl.BlockSpec((1, tile_h * W, cout), lambda b, t: (b, t, 0)),   # scatter residual
        ],
        out_specs=pl.BlockSpec((1, tile_h * W, cout), lambda b, t: (b, t, 0)),
        scratch_shapes=[pltpu.VMEM((tile_h + 2, W + 2, CV), jnp.float32)],
        compiler_params=pltpu.CompilerParams(
            dimension_semantics=("parallel", "parallel")),
    )(vminmax, vis, vis, vis, wfold, sp_dense)


# --------------------------------------------------------------------------
# Forward wrapper
# --------------------------------------------------------------------------
def pointpillar_scatter_forward(pillar_features, voxel_coords, points_mean, vis,
                                conv_visi_weight, grid_size,
                                scatter_tile_rows=None, conv_tile_h=None):
    nx, ny, nz = grid_size
    assert nz == 1
    B, H, W, CV = vis.shape
    assert (H, W) == (ny, nx)
    # TODO(synk): PyTorch derives batch_size from coords[:, 0].max()+1 at runtime
    # (data-dependent shape); here it is static and taken from `vis`, which must
    # agree for the residual add anyway.  Pillars with batch >= B are dropped.
    nynx = ny * nx
    C = pillar_features.shape[1]
    cout = conv_visi_weight.shape[-1]

    # ---- scatter prep: sort pillars by (batch, flat index); build per-tile
    # [start, end) offsets.  Only 1-D int32 arrays go to SMEM.
    coords = voxel_coords.astype(jnp.int32)
    flat_idx = coords[:, 1] + coords[:, 2] * nx + coords[:, 3]  # z + y*nx + x (torch; z==0)
    key = coords[:, 0] * nynx + flat_idx
    order = jnp.argsort(key)
    key_s = key[order]
    idx_s = flat_idx[order].astype(jnp.int32)
    pf_s = pillar_features[order]
    pmean = points_mean.reshape(points_mean.shape[0], -1)       # (P, 3)
    # torch: pointsmean = dense[:, 63:, ...] -> channel 63 + the 3 mean channels.
    pm4_s = jnp.concatenate([pillar_features[:, C - 1:C], pmean], axis=-1)[order]

    tile_rows = scatter_tile_rows or _pick_tile(nynx, 4096)
    assert nynx % tile_rows == 0 and (tile_rows % 8 == 0 or tile_rows == nynx)
    num_tiles = nynx // tile_rows
    g = jnp.arange(B * num_tiles + 1, dtype=jnp.int32)
    bounds = (g // num_tiles) * nynx + (g % num_tiles) * tile_rows
    tile_starts = jnp.searchsorted(key_s, bounds, side="left").astype(jnp.int32)

    sp_dense, pm_dense = pillar_scatter(tile_starts, idx_s, pf_s, pm4_s,
                                        B, nynx, tile_rows)

    # ---- fused encode + 3x3 conv + ReLU + residual add (raw vis read once).
    vminmax = jnp.stack([jnp.min(vis), jnp.max(vis)]).astype(jnp.float32)
    wfold = conv_visi_weight.reshape(3, 3 * CV, cout).astype(jnp.float32)

    tile_h = conv_tile_h or _pick_tile(H, 32, 1)
    try:
        out_flat = conv_visi_relu_add(vminmax, vis, wfold, sp_dense, tile_h,
                                      fold_kx=True)
        out_flat = jax.block_until_ready(out_flat)
    except Exception:
        # TODO(synk): the K=120 fold needs unaligned lane concatenation; fall
        # back to per-tap K=40 matmuls if this Mosaic build rejects it.
        out_flat = conv_visi_relu_add(vminmax, vis, wfold, sp_dense, tile_h,
                                      fold_kx=False)

    # Final NCHW layout to match the PyTorch module.  TODO(synk): drop these
    # transposes (keep NHWC) if the downstream backbone is also JAX/Pallas.
    spatial_features = jnp.transpose(out_flat.reshape(B, H, W, cout), (0, 3, 1, 2))
    pointsmean = jnp.transpose(pm_dense.reshape(B, H, W, 4), (0, 3, 1, 2))
    return {"spatial_features": spatial_features, "pointsmean": pointsmean}


# --------------------------------------------------------------------------
# Pure-JAX reference (for correctness check). Matmul inputs are cast to bf16
# (f32 accumulation) to mirror the TPU-native path used by the kernel.
# --------------------------------------------------------------------------
def reference_forward(pillar_features, coords, points_mean, vis, w, grid_size):
    nx, ny, nz = grid_size
    B = vis.shape[0]
    C = pillar_features.shape[1]
    visf = vis.astype(jnp.float32)
    vmin, vmax = jnp.min(visf), jnp.max(visf)
    enc = jnp.where(visf == vmax, 0.7,
                    jnp.where(visf == vmin, 0.4, 0.5)).astype(jnp.float32)
    pf67 = jnp.concatenate(
        [pillar_features, points_mean.reshape(points_mean.shape[0], -1)], axis=-1)
    idx = coords[:, 1] + coords[:, 2] * nx + coords[:, 3]
    dense = jnp.zeros((B, ny * nx, pf67.shape[-1]), jnp.float32)
    dense = dense.at[coords[:, 0], idx, :].set(pf67)
    dense = dense.reshape(B, ny, nx, -1)
    conv = jax.lax.conv_general_dilated(
        enc.astype(jnp.bfloat16), w.astype(jnp.bfloat16),
        window_strides=(1, 1), padding="SAME",
        dimension_numbers=("NHWC", "HWIO", "NHWC"),
        preferred_element_type=jnp.float32)
    sf = jnp.maximum(conv, 0.0) + dense[..., :C]
    pm = dense[..., C - 1:]
    return jnp.transpose(sf, (0, 3, 1, 2)), jnp.transpose(pm, (0, 3, 1, 2))


if __name__ == "__main__":
    key = jax.random.PRNGKey(0)
    k_pf, k_pm, k_vis, k_w, k_perm = jax.random.split(key, 5)

    B, ny, nx, nz = 2, 16, 16, 1
    grid_size = (nx, ny, nz)
    P_per_batch = 6
    P = B * P_per_batch

    pillar_features = jax.random.normal(k_pf, (P, NUM_BEV_FEATURES), jnp.float32)
    points_mean = jax.random.normal(k_pm, (P, 1, PMEAN_CHANNELS), jnp.float32)

    # Unique (y, x) coords; batch column guarantees coords[:,0].max()+1 == B.
    flat = jax.random.permutation(k_perm, ny * nx)[:P]
    ys = (flat // nx).astype(jnp.int32)
    xs = (flat % nx).astype(jnp.int32)
    bs = jnp.repeat(jnp.arange(B, dtype=jnp.int32), P_per_batch)
    zs = jnp.zeros((P,), jnp.int32)
    voxel_coords = jnp.stack([bs, zs, ys, xs], axis=1)        # (P, 4): [b, z, y, x]

    vis = jax.random.randint(k_vis, (B, ny, nx, VIS_CHANNELS), 0, 3,
                             dtype=jnp.int32)

    # Deterministic conv_visi weight (HWIO); conv has no bias.
    conv_visi_weight = jax.random.normal(
        k_w, (3, 3, VIS_CHANNELS, NUM_BEV_FEATURES), jnp.float32) * 0.05

    out = pointpillar_scatter_forward(
        pillar_features, voxel_coords, points_mean, vis, conv_visi_weight,
        grid_size, scatter_tile_rows=128, conv_tile_h=8)   # multi-tile + halo paths
    sf = jax.block_until_ready(out["spatial_features"])
    pm = jax.block_until_ready(out["pointsmean"])

    ref_sf, ref_pm = reference_forward(pillar_features, voxel_coords, points_mean,
                                       vis, conv_visi_weight, grid_size)
    np.testing.assert_allclose(np.asarray(pm), np.asarray(ref_pm),
                               rtol=1e-6, atol=1e-6)
    np.testing.assert_allclose(np.asarray(sf), np.asarray(ref_sf),
                               rtol=2e-3, atol=2e-3)

    print("KERNEL_OK")
</pallas_src>

<mosaic_0001>
module attributes {stable_mosaic.version = 11 : i64} {
  func.func @_scatter_kernel(%arg0: i32, %arg1: i32, %arg2: memref<5xi32, #tpu.memory_space<smem>>, %arg3: memref<12xi32, #tpu.memory_space<smem>>, %arg4: memref<12x64xf32, #tpu.memory_space<vmem>>, %arg5: memref<12x4xf32, #tpu.memory_space<vmem>>, %arg6: memref<1x128x64xf32, #tpu.memory_space<vmem>>, %arg7: memref<1x128x4xf32, #tpu.memory_space<vmem>>) attributes {dimension_semantics = [#tpu.dimension_semantics<parallel>, #tpu.dimension_semantics<parallel>], iteration_bounds = array<i64: 2, 2>, scalar_prefetch = 2 : i64, scratch_operands = 0 : i64, tpu.core_type = #tpu.core_type<tc>, window_params = [{pipeline_mode = #tpu.pipeline_mode<synchronous>, transform_indices = @transform_0, window_bounds = array<i64: 12, 64>}, {pipeline_mode = #tpu.pipeline_mode<synchronous>, transform_indices = @transform_1, window_bounds = array<i64: 12, 4>}, {transform_indices = @transform_2, window_bounds = array<i64: 1, 128, 64>}, {transform_indices = @transform_3, window_bounds = array<i64: 1, 128, 4>}]} {
    %cst = arith.constant 0.000000e+00 : f32
    %0 = vector.broadcast %cst : f32 to vector<128x64xf32>
    %c0 = arith.constant 0 : index
    %c0_0 = arith.constant 0 : index
    %c0_1 = arith.constant 0 : index
    %1 = vector.load %arg6[%c0, %c0_0, %c0_1] : memref<1x128x64xf32, #tpu.memory_space<vmem>>, vector<1x128x64xf32>
    %2 = vector.shape_cast %1 : vector<1x128x64xf32> to vector<128x64xf32>
    %3 = vector.shape_cast %0 : vector<128x64xf32> to vector<1x128x64xf32>
    tpu.vector_store %arg6[%c0, %c0_0, %c0_1], %3 {strides = array<i32>} : memref<1x128x64xf32, #tpu.memory_space<vmem>>, vector<1x128x64xf32>,
    %cst_2 = arith.constant 0.000000e+00 : f32
    %4 = vector.broadcast %cst_2 : f32 to vector<128x4xf32>
    %c0_3 = arith.constant 0 : index
    %c0_4 = arith.constant 0 : index
    %c0_5 = arith.constant 0 : index
    %5 = vector.load %arg7[%c0_3, %c0_4, %c0_5] : memref<1x128x4xf32, #tpu.memory_space<vmem>>, vector<1x128x4xf32>
    %6 = vector.shape_cast %5 : vector<1x128x4xf32> to vector<128x4xf32>
    %7 = vector.shape_cast %4 : vector<128x4xf32> to vector<1x128x4xf32>
    tpu.vector_store %arg7[%c0_3, %c0_4, %c0_5], %7 {strides = array<i32>} : memref<1x128x4xf32, #tpu.memory_space<vmem>>, vector<1x128x4xf32>,
    %c2_i32 = arith.constant 2 : i32
    %8 = arith.muli %arg0, %c2_i32 : i32
    %9 = arith.addi %8, %arg1 : i32
    %10 = arith.index_cast %9 : i32 to index
    %11 = memref.load %arg2[%10] : memref<5xi32, #tpu.memory_space<smem>>
    %c1_i32 = arith.constant 1 : i32
    %12 = arith.addi %9, %c1_i32 : i32
    %13 = arith.index_cast %12 : i32 to index
    %14 = memref.load %arg2[%13] : memref<5xi32, #tpu.memory_space<smem>>
    %c128_i32 = arith.constant 128 : i32
    %15 = arith.muli %arg1, %c128_i32 : i32
    %c0_i32 = arith.constant 0 : i32
    %16 = arith.subi %14, %11 : i32
    %17 = arith.addi %11, %16 : i32
    %c1_i32_6 = arith.constant 1 : i32
    scf.for %arg8 = %11 to %17 step %c1_i32_6  : i32 {
      %18 = arith.index_cast %arg8 : i32 to index
      %19 = memref.load %arg3[%18] : memref<12xi32, #tpu.memory_space<smem>>
      %20 = arith.subi %19, %15 : i32
      %21 = arith.index_cast %arg8 : i32 to index
      %c0_7 = arith.constant 0 : index
      %22 = vector.load %arg4[%21, %c0_7] : memref<12x64xf32, #tpu.memory_space<vmem>>, vector<1x64xf32>
      %23 = vector.shape_cast %22 : vector<1x64xf32> to vector<64xf32>
      %c0_8 = arith.constant 0 : index
      %24 = arith.index_cast %20 : i32 to index
      %c0_9 = arith.constant 0 : index
      %25 = vector.load %arg6[%c0_8, %24, %c0_9] : memref<1x128x64xf32, #tpu.memory_space<vmem>>, vector<1x1x64xf32>
      %26 = vector.shape_cast %25 : vector<1x1x64xf32> to vector<64xf32>
      %27 = vector.shape_cast %23 : vector<64xf32> to vector<1x1x64xf32>
      tpu.vector_store %arg6[%c0_8, %24, %c0_9], %27 {strides = array<i32>} : memref<1x128x64xf32, #tpu.memory_space<vmem>>, vector<1x1x64xf32>,
      %28 = arith.index_cast %arg8 : i32 to index
      %c0_10 = arith.constant 0 : index
      %29 = vector.load %arg5[%28, %c0_10] : memref<12x4xf32, #tpu.memory_space<vmem>>, vector<1x4xf32>
      %30 = vector.shape_cast %29 : vector<1x4xf32> to vector<4xf32>
      %c0_11 = arith.constant 0 : index
      %31 = arith.index_cast %20 : i32 to index
      %c0_12 = arith.constant 0 : index
      %32 = vector.load %arg7[%c0_11, %31, %c0_12] : memref<1x128x4xf32, #tpu.memory_space<vmem>>, vector<1x1x4xf32>
      %33 = vector.shape_cast %32 : vector<1x1x4xf32> to vector<4xf32>
      %34 = vector.shape_cast %30 : vector<4xf32> to vector<1x1x4xf32>
      tpu.vector_store %arg7[%c0_11, %31, %c0_12], %34 {strides = array<i32>} : memref<1x128x4xf32, #tpu.memory_space<vmem>>, vector<1x1x4xf32>,
    }
    return
  }
  func.func @transform_0(%arg0: i32, %arg1: i32, %arg2: memref<5xi32, #tpu.memory_space<smem>>, %arg3: memref<12xi32, #tpu.memory_space<smem>>) -> (i32, i32) {
    %c0_i32 = arith.constant 0 : i32
    %c0_i32_0 = arith.constant 0 : i32
    %c0_i32_1 = arith.constant 0 : i32
    return %c0_i32, %c0_i32_0 : i32, i32
  }
  func.func @transform_1(%arg0: i32, %arg1: i32, %arg2: memref<5xi32, #tpu.memory_space<smem>>, %arg3: memref<12xi32, #tpu.memory_space<smem>>) -> (i32, i32) {
    %c0_i32 = arith.constant 0 : i32
    %c0_i32_0 = arith.constant 0 : i32
    %c0_i32_1 = arith.constant 0 : i32
    return %c0_i32, %c0_i32_0 : i32, i32
  }
  func.func @transform_2(%arg0: i32, %arg1: i32, %arg2: memref<5xi32, #tpu.memory_space<smem>>, %arg3: memref<12xi32, #tpu.memory_space<smem>>) -> (i32, i32, i32) {
    %c0_i32 = arith.constant 0 : i32
    %c0_i32_0 = arith.constant 0 : i32
    return %arg0, %arg1, %c0_i32 : i32, i32, i32
  }
  func.func @transform_3(%arg0: i32, %arg1: i32, %arg2: memref<5xi32, #tpu.memory_space<smem>>, %arg3: memref<12xi32, #tpu.memory_space<smem>>) -> (i32, i32, i32) {
    %c0_i32 = arith.constant 0 : i32
    %c0_i32_0 = arith.constant 0 : i32
    return %arg0, %arg1, %c0_i32 : i32, i32, i32
  }
}

</mosaic_0001>

<llo_original>
// kernel: tpu_custom_call.1
$region0: #{tpu_custom_call.1}
  #allocation0 [shape = 'u32[]', space=smem, size = 0x4, offset = 0x4, fixed_abs, tag = 'smem constant byte address 0x4 - core index']
  #allocation1 [shape = 'u32[144,128]{1,0:T(1,128)}', space=vmem, size = 0x12000, scoped, tag = 'internal scratch']
  #allocation2 [shape = 's32[1]{0}', space=sflag, size = 0x4, scoped, tag = 'scoped memory for tpu_custom_call.1']
  #allocation3 [shape = 'u8[512]{0}', space=smem, size = 0x200, scoped, tag = 'prefetched SMEM operand 0']
  #allocation4 [shape = 'u8[512]{0}', space=smem, size = 0x200, scoped, tag = 'prefetched SMEM operand 1']
  %s0 = inlined_call_operand.vmem [shape: s32[5], index: 0, kind: input, shape index: {}]
  %s1 = inlined_call_operand.vmem [shape: s32[12], index: 1, kind: input, shape index: {}]
  %s2 = inlined_call_operand.vmem [shape: f32[12,64], index: 2, kind: input, shape index: {}]
  %s3 = inlined_call_operand.vmem [shape: f32[12,4], index: 3, kind: input, shape index: {}]
  %s4 = inlined_call_operand.vmem [shape: f32[2,256,64], index: 4, kind: output, shape index: {0}]
  %s5 = inlined_call_operand.vmem [shape: f32[2,256,4], index: 5, kind: output, shape index: {1}]
  %6 = xla_tuple %s4, %s5
  %s7 = sld [smem:[#allocation0]]
  $region56: #{tpu_custom_call.1} parent=0
    _
  %s9 = ssub.s32 1, %s7
  %s10 = scalar_select 0, %s9, %s7
  %s11 = sshll.u32 %s0, 4
  %s12 = int_to_ptr.vmem [resolvable:$true] %s11
  %14 = dma.vmem_to_smem %s12, 16, [#allocation3], [#allocation2]
  %s15 = sshll.u32 %s1, 4
  %s16 = int_to_ptr.vmem [resolvable:$true] %s15
  %18 = dma.vmem_to_smem %s16, 16, [#allocation4], [#allocation2]
  %19 = dma.done [#allocation2], 32
  %20 = sfence
  loop: start=0, step=1, limit=6
  $region2: #{tpu_custom_call.1} parent=0 // loop_pre_header
    _
  $region3: #{tpu_custom_call.1} parent=0 // loop_header
    %s22 = sphi 0, %s26
    %p23 = scmp.ge.s32.totalorder %s22, 6
    %s29 = sphi 0, %s41
    %s30 = sphi 0, %s37
    %s31 = sphi 0, %s29
    %s32 = sphi 0, %s30
    %s33 = sphi 0, %s31
    %s34 = sphi 0, %s32
    %s42 = sphi 0, %s42
    %s44 = sphi 0, %s42
    %s45 = sphi 0, %s44
    %s59 = sphi 0, %s45
    %s63 = sphi 0, %s63
    %s65 = sphi 0, %s63
    %s66 = sphi 0, %s65
    %s80 = sphi 0, %s66
    %s88 = sphi 0, %s90
    %s91 = sphi 0, %s88
    %s92 = sphi 0, %s91
    %s108 = sphi 0, %s92
    %s116 = sphi 0, %s118
    %s119 = sphi 0, %s116
    %s120 = sphi 0, %s119
    %s136 = sphi 0, %s120
  $region4: #{tpu_custom_call.1} parent=0 // loop_header_branch
    %25 = sbr.rel (%p23) target = $region8
  $region5: #{tpu_custom_call.1} parent=0 // loop_body
    %s27 = ssub.s32 %s22, 1
    %s28 = ssub.s32 %s22, 2
    %s35 = sadd.s32 1, %s30
    %p36 = scmp.ge.s32.totalorder %s35, 2
    %s37 = scalar_select %p36, 0, %s35
    %s38 = sadd.s32 1, %s29
    %s39 = scalar_select %p36, %s38, %s29
    %p40 = scmp.ge.s32.totalorder %s39, 2
    %s41 = scalar_select %p40, 0, %s39
    %s43 = sadd.s32 %s42, 1
    %p46 = scmp.eq.s32.totalorder %s22, 3
    %p47 = scmp.ne.s32.totalorder %s42, %s44
    %p48 = scmp.eq.s32.totalorder %s22, 0
    %p49 = por %p47, %p48
    %p50 = scmp.ne.s32.totalorder %s42, %s44
    %p51 = scmp.eq.s32.totalorder %s27, 3
    %p52 = por %p50, %p51
    %p53 = scmp.ne.s32.totalorder %s44, %s45
    %p54 = scmp.eq.s32.totalorder %s27, 0
    %p55 = por %p53, %p54
    %p56 = scmp.ne.s32.totalorder %s44, %s45
    %p57 = scmp.eq.s32.totalorder %s28, 3
    %p58 = por %p56, %p57
    %p60 = scmp.ne.s32.totalorder %s45, %s59
    %p61 = scmp.eq.s32.totalorder %s28, 0
    %p62 = por %p60, %p61
    %s64 = sadd.s32 %s63, 1
    %p67 = scmp.eq.s32.totalorder %s22, 3
    %p68 = scmp.ne.s32.totalorder %s63, %s65
    %p69 = scmp.eq.s32.totalorder %s22, 0
    %p70 = por %p68, %p69
    %p71 = scmp.ne.s32.totalorder %s63, %s65
    %p72 = scmp.eq.s32.totalorder %s27, 3
    %p73 = por %p71, %p72
    %p74 = scmp.ne.s32.totalorder %s65, %s66
    %p75 = scmp.eq.s32.totalorder %s27, 0
    %p76 = por %p74, %p75
    %p77 = scmp.ne.s32.totalorder %s65, %s66
    %p78 = scmp.eq.s32.totalorder %s28, 3
    %p79 = por %p77, %p78
    %p81 = scmp.ne.s32.totalorder %s66, %s80
    %p82 = scmp.eq.s32.totalorder %s28, 0
    %p83 = por %p81, %p82
    %s84 = ssub.s32 %s29, %s41
    %s85 = ssub.s32 %s30, %s37
    %s86 = sor.u32 %s84, %s85
    %p87 = scmp.eq.s32.totalorder %s86, 0
    %s89 = sadd.s32 %s88, 1
    %s90 = scalar_select %p87, %s88, %s89
    %p93 = pneg %p87
    %p94 = scmp.eq.s32.totalorder %s22, 3
    %p95 = por %p93, %p94
    %p96 = scmp.ne.s32.totalorder %s88, %s91
    %p97 = scmp.eq.s32.totalorder %s22, 0
    %p98 = por %p96, %p97
    %p99 = scmp.ne.s32.totalorder %s88, %s91
    %p100 = scmp.eq.s32.totalorder %s27, 3
    %p101 = por %p99, %p100
    %p102 = scmp.ne.s32.totalorder %s91, %s92
    %p103 = scmp.eq.s32.totalorder %s27, 0
    %p104 = por %p102, %p103
    %p105 = scmp.ne.s32.totalorder %s91, %s92
    %p106 = scmp.eq.s32.totalorder %s28, 3
    %p107 = por %p105, %p106
    %p109 = scmp.ne.s32.totalorder %s92, %s108
    %p110 = scmp.eq.s32.totalorder %s28, 0
    %p111 = por %p109, %p110
    %s112 = ssub.s32 %s29, %s41
    %s113 = ssub.s32 %s30, %s37
    %s114 = sor.u32 %s112, %s113
    %p115 = scmp.eq.s32.totalorder %s114, 0
    %s117 = sadd.s32 %s116, 1
    %s118 = scalar_select %p115, %s116, %s117
    %p121 = pneg %p115
    %p122 = scmp.eq.s32.totalorder %s22, 3
    %p123 = por %p121, %p122
    %p124 = scmp.ne.s32.totalorder %s116, %s119
    %p125 = scmp.eq.s32.totalorder %s22, 0
    %p126 = por %p124, %p125
    %p127 = scmp.ne.s32.totalorder %s116, %s119
    %p128 = scmp.eq.s32.totalorder %s27, 3
    %p129 = por %p127, %p128
    %p130 = scmp.ne.s32.totalorder %s119, %s120
    %p131 = scmp.eq.s32.totalorder %s27, 0
    %p132 = por %p130, %p131
    %p133 = scmp.ne.s32.totalorder %s119, %s120
    %p134 = scmp.eq.s32.totalorder %s28, 3
    %p135 = por %p133, %p134
    %p137 = scmp.ne.s32.totalorder %s120, %s136
    %p138 = scmp.eq.s32.totalorder %s28, 0
    %p139 = por %p137, %p138
    %p140 = scmp.le.s32.totalorder 1, %s22
    %p141 = scmp.lt.s32.totalorder %s22, 5
    %p142 = pnand %p140, %p141
    %p143 = pneg %p142
    // Predicated region
    $region9: #{tpu_custom_call.1} parent=5 // pred_check
      _
    $region10: #{tpu_custom_call.1} parent=5 // pred_check_branch
      %145 = sbr.rel (%p142) target = $region12
    $region11: #{tpu_custom_call.1} parent=5 // pred_region
      %s146 = ssub.s32 %s22, 1
      // Predicated region
      $region13: #{tpu_custom_call.1} parent=11 // pred_check
        %p147 = pneg %p55
      $region14: #{tpu_custom_call.1} parent=11 // pred_check_branch
        %149 = sbr.rel (%p147) target = $region16
      $region15: #{tpu_custom_call.1} parent=11 // pred_region
        _
      $region16: #{tpu_custom_call.1} parent=11 // pred_fallthru
        _
      // Predicated region
      $region17: #{tpu_custom_call.1} parent=11 // pred_check
        %p150 = pneg %p76
      $region18: #{tpu_custom_call.1} parent=11 // pred_check_branch
        %152 = sbr.rel (%p150) target = $region20
      $region19: #{tpu_custom_call.1} parent=11 // pred_region
        _
      $region20: #{tpu_custom_call.1} parent=11 // pred_fallthru
        _
    $region12: #{tpu_custom_call.1} parent=5 // pred_fallthru
      _
    %p153 = scmp.lt.s32.totalorder %s22, 4
    // Predicated region
    $region21: #{tpu_custom_call.1} parent=5 // pred_check
      %p154 = pneg %p153
    $region22: #{tpu_custom_call.1} parent=5 // pred_check_branch
      %156 = sbr.rel (%p154) target = $region24
    $region23: #{tpu_custom_call.1} parent=5 // pred_region
      _
    $region24: #{tpu_custom_call.1} parent=5 // pred_fallthru
      _
    %p157 = scmp.le.s32.totalorder 1, %s22
    %p158 = scmp.lt.s32.totalorder %s22, 5
    %p159 = pnand %p157, %p158
    %p160 = pneg %p159
    // Predicated region
    $region25: #{tpu_custom_call.1} parent=5 // pred_check
      _
    $region26: #{tpu_custom_call.1} parent=5 // pred_check_branch
      %162 = sbr.rel (%p159) target = $region28
    $region27: #{tpu_custom_call.1} parent=5 // pred_region
      %s163 = ssub.s32 %s22, 1
      %p164 = pneg %p55
      %p165 = pneg %p52
      %p166 = pneg %p76
      %p167 = pneg %p73
      %p168 = pneg %p104
      %p169 = pneg %p101
      %s170 = smul.u32 16, %s32
      %p171 = scmp.lt.s32.totalorder %s31, 1
      %s172 = scalar_select %p171, %s31, 1
      %p173 = scmp.lt.s32.totalorder %s170, 31
      %s174 = scalar_select %p173, %s170, 31
      %s175 = smul.addr %s172, 32
      %s176 = sadd.s32 %s174, %s175
      %s177 = smul.addr %s176, 8
      %s178 = scalar_lea.vmem %s4, %s177
      %p179 = pneg %p132
      %p180 = pneg %p129
      %s181 = smul.u32 16, %s32
      %p182 = scmp.lt.s32.totalorder %s31, 1
      %s183 = scalar_select %p182, %s31, 1
      %p184 = scmp.lt.s32.totalorder %s181, 31
      %s185 = scalar_select %p184, %s181, 31
      %s186 = smul.addr %s183, 32
      %s187 = sadd.s32 %s185, %s186
      %s188 = smul.addr %s187, 8
      %s189 = scalar_lea.vmem %s5, %s188
      %s190 = smul.u32 16, %s32
      %p191 = scmp.lt.s32.totalorder %s31, 1
      %s192 = scalar_select %p191, %s31, 1
      %p193 = scmp.lt.s32.totalorder %s190, 31
      %s194 = scalar_select %p193, %s190, 31
      %s195 = smul.addr %s192, 32
      %s196 = sadd.s32 %s194, %s195
      %s197 = smul.addr %s196, 8
      %s198 = scalar_lea.vmem %s4, %s197
      %s199 = smul.u32 16, %s32
      %s200 = smul.u32 16, %s32
      %p201 = scmp.lt.s32.totalorder %s31, 1
      %s202 = scalar_select %p201, %s31, 1
      %p203 = scmp.lt.s32.totalorder %s200, 31
      %s204 = scalar_select %p203, %s200, 31
      %s205 = smul.addr %s202, 32
      %s206 = sadd.s32 %s204, %s205
      %s207 = smul.addr %s206, 8
      %s208 = scalar_lea.vmem %s5, %s207
      %s209 = smul.u32 16, %s32
      %vm210 = vcmask 523264
      %211 = vst.msk [vmem:[%s198] sm:$0xff] %vm210, 0.0
      %212 = vst.msk [vmem:[%s198 + $0x8] sm:$0xff] %vm210, 0.0
      %213 = vst.msk [vmem:[%s198 + $0x10] sm:$0xff] %vm210, 0.0
      %214 = vst.msk [vmem:[%s198 + $0x18] sm:$0xff] %vm210, 0.0
      %215 = vst.msk [vmem:[%s198 + $0x20] sm:$0xff] %vm210, 0.0
      %216 = vst.msk [vmem:[%s198 + $0x28] sm:$0xff] %vm210, 0.0
      %217 = vst.msk [vmem:[%s198 + $0x30] sm:$0xff] %vm210, 0.0
      %218 = vst.msk [vmem:[%s198 + $0x38] sm:$0xff] %vm210, 0.0
      %219 = vst.msk [vmem:[%s198 + $0x40] sm:$0xff] %vm210, 0.0
      %220 = vst.msk [vmem:[%s198 + $0x48] sm:$0xff] %vm210, 0.0
      %221 = vst.msk [vmem:[%s198 + $0x50] sm:$0xff] %vm210, 0.0
      %222 = vst.msk [vmem:[%s198 + $0x58] sm:$0xff] %vm210, 0.0
      %223 = vst.msk [vmem:[%s198 + $0x60] sm:$0xff] %vm210, 0.0
      %224 = vst.msk [vmem:[%s198 + $0x68] sm:$0xff] %vm210, 0.0
      %225 = vst.msk [vmem:[%s198 + $0x70] sm:$0xff] %vm210, 0.0
      %226 = vst.msk [vmem:[%s198 + $0x78] sm:$0xff] %vm210, 0.0
      %vm227 = vcmask 31744
      %228 = vst.msk [vmem:[%s208] sm:$0xff] %vm227, 0.0
      %229 = vst.msk [vmem:[%s208 + $0x8] sm:$0xff] %vm227, 0.0
      %230 = vst.msk [vmem:[%s208 + $0x10] sm:$0xff] %vm227, 0.0
      %231 = vst.msk [vmem:[%s208 + $0x18] sm:$0xff] %vm227, 0.0
      %232 = vst.msk [vmem:[%s208 + $0x20] sm:$0xff] %vm227, 0.0
      %233 = vst.msk [vmem:[%s208 + $0x28] sm:$0xff] %vm227, 0.0
      %234 = vst.msk [vmem:[%s208 + $0x30] sm:$0xff] %vm227, 0.0
      %235 = vst.msk [vmem:[%s208 + $0x38] sm:$0xff] %vm227, 0.0
      %236 = vst.msk [vmem:[%s208 + $0x40] sm:$0xff] %vm227, 0.0
      %237 = vst.msk [vmem:[%s208 + $0x48] sm:$0xff] %vm227, 0.0
      %238 = vst.msk [vmem:[%s208 + $0x50] sm:$0xff] %vm227, 0.0
      %239 = vst.msk [vmem:[%s208 + $0x58] sm:$0xff] %vm227, 0.0
      %240 = vst.msk [vmem:[%s208 + $0x60] sm:$0xff] %vm227, 0.0
      %241 = vst.msk [vmem:[%s208 + $0x68] sm:$0xff] %vm227, 0.0
      %242 = vst.msk [vmem:[%s208 + $0x70] sm:$0xff] %vm227, 0.0
      %243 = vst.msk [vmem:[%s208 + $0x78] sm:$0xff] %vm227, 0.0
      %s244 = smul.u32 %s31, 2
      %s245 = sadd.s32 %s244, %s32
      %s246 = sld [smem:[#allocation3 + %s245]]
      %s247 = sadd.s32 %s245, 1
      %s248 = sld [smem:[#allocation3 + %s247]]
      %s249 = smul.u32 %s32, 128
      // While loop
      $region29: #{tpu_custom_call.1} parent=27 // loop_pre_header
        _
      $region30: #{tpu_custom_call.1} parent=27 // loop_header
        %s251 = sphi %s246, %s253
        %p252 = scmp.ge.s32.totalorder %s251, %s248
      $region31: #{tpu_custom_call.1} parent=27 // loop_header_branch
        %255 = sbr.rel (%p252) target = $region35
      $region32: #{tpu_custom_call.1} parent=27 // loop_body
        %s256 = sld [smem:[#allocation4 + %s251]]
        %s257 = ssub.s32 %s256, %s249
        %s258 = scalar_lea.vmem %s2, %s251
        %v259 = vld [vmem:[%s258] sm:$0x1]
        %s260 = scalar_lea.vmem %s198, %s257
        %vm261 = vcmask 516096
        %262 = vst.msk [vmem:[%s260] sm:$0x1] %vm261, %v259
        %s263 = scalar_lea.vmem %s3, %s251
        %v264 = vld [vmem:[%s263] sm:$0x1]
        %s265 = scalar_lea.vmem %s208, %s257
        %vm266 = vcmask 24576
        %267 = vst.msk [vmem:[%s265] sm:$0x1] %vm266, %v264
      $region33: #{tpu_custom_call.1} parent=27 // loop_footer
        %s253 = sadd.s32 %s251, 1
      $region34: #{tpu_custom_call.1} parent=27 // loop_footer_branch
        %250 = sbr.rel target = $region30
      $region35: #{tpu_custom_call.1} parent=27 // loop_exit
        _
      %s268 = smul.u32 16, %s32
      %p269 = scmp.lt.s32.totalorder %s31, 1
      %s270 = scalar_select %p269, %s31, 1
      %p271 = scmp.lt.s32.totalorder %s268, 31
      %s272 = scalar_select %p271, %s268, 31
      %s273 = smul.addr %s270, 32
      %s274 = sadd.s32 %s272, %s273
      %s275 = smul.addr %s274, 8
      %s276 = scalar_lea.vmem %s4, %s275
      %s277 = smul.u32 16, %s32
      %p278 = scmp.lt.s32.totalorder %s31, 1
      %s279 = scalar_select %p278, %s31, 1
      %p280 = scmp.lt.s32.totalorder %s277, 31
      %s281 = scalar_select %p280, %s277, 31
      %s282 = smul.addr %s279, 32
      %s283 = sadd.s32 %s281, %s282
      %s284 = smul.addr %s283, 8
      %s285 = scalar_lea.vmem %s5, %s284
      // Predicated region
      $region36: #{tpu_custom_call.1} parent=27 // pred_check
        %p286 = pneg %p101
      $region37: #{tpu_custom_call.1} parent=27 // pred_check_branch
        %288 = sbr.rel (%p286) target = $region39
      $region38: #{tpu_custom_call.1} parent=27 // pred_region
        %s289 = smul.u32 16, %s32
      $region39: #{tpu_custom_call.1} parent=27 // pred_fallthru
        _
      // Predicated region
      $region40: #{tpu_custom_call.1} parent=27 // pred_check
        %p290 = pneg %p129
      $region41: #{tpu_custom_call.1} parent=27 // pred_check_branch
        %292 = sbr.rel (%p290) target = $region43
      $region42: #{tpu_custom_call.1} parent=27 // pred_region
        %s293 = smul.u32 16, %s32
      $region43: #{tpu_custom_call.1} parent=27 // pred_fallthru
        _
    $region28: #{tpu_custom_call.1} parent=5 // pred_fallthru
      _
    %p294 = scmp.le.s32.totalorder 2, %s22
    // Predicated region
    $region44: #{tpu_custom_call.1} parent=5 // pred_check
      %p295 = pneg %p294
    $region45: #{tpu_custom_call.1} parent=5 // pred_check_branch
      %297 = sbr.rel (%p295) target = $region47
    $region46: #{tpu_custom_call.1} parent=5 // pred_region
      %s298 = ssub.s32 %s22, 2
      // Predicated region
      $region48: #{tpu_custom_call.1} parent=46 // pred_check
        %p299 = pneg %p107
      $region49: #{tpu_custom_call.1} parent=46 // pred_check_branch
        %301 = sbr.rel (%p299) target = $region51
      $region50: #{tpu_custom_call.1} parent=46 // pred_region
        %s302 = smul.u32 16, %s34
        %p303 = scmp.lt.s32.totalorder %s33, 1
        %s304 = scalar_select %p303, %s33, 1
        %p305 = scmp.lt.s32.totalorder %s302, 31
        %s306 = scalar_select %p305, %s302, 31
        %s307 = smul.addr %s304, 32
        %s308 = sadd.s32 %s306, %s307
        %s309 = smul.addr %s308, 8
        %s310 = scalar_lea.vmem %s4, %s309
      $region51: #{tpu_custom_call.1} parent=46 // pred_fallthru
        _
      // Predicated region
      $region52: #{tpu_custom_call.1} parent=46 // pred_check
        %p311 = pneg %p135
      $region53: #{tpu_custom_call.1} parent=46 // pred_check_branch
        %313 = sbr.rel (%p311) target = $region55
      $region54: #{tpu_custom_call.1} parent=46 // pred_region
        %s314 = smul.u32 16, %s34
        %p315 = scmp.lt.s32.totalorder %s33, 1
        %s316 = scalar_select %p315, %s33, 1
        %p317 = scmp.lt.s32.totalorder %s314, 31
        %s318 = scalar_select %p317, %s314, 31
        %s319 = smul.addr %s316, 32
        %s320 = sadd.s32 %s318, %s319
        %s321 = smul.addr %s320, 8
        %s322 = scalar_lea.vmem %s5, %s321
      $region55: #{tpu_custom_call.1} parent=46 // pred_fallthru
        _
    $region47: #{tpu_custom_call.1} parent=5 // pred_fallthru
      _
  $region6: #{tpu_custom_call.1} parent=0 // loop_footer
    %s26 = sadd.s32 1, %s22
  $region7: #{tpu_custom_call.1} parent=0 // loop_footer_branch
    %21 = sbr.rel target = $region3
  $region8: #{tpu_custom_call.1} parent=0 // loop_exit
    _

</llo_original>
